<compile_context>
chip_gen: v7x
topology: tpu7x:2x2x1
jax: 0.10.0
libtpu: 0.0.40
codegen_flags: <defaults>
</compile_context>

<pallas_src>
import functools

import jax
import jax.numpy as jnp
from jax import lax
from jax.experimental import pallas as pl
from jax.experimental.pallas import tpu as pltpu

_LANE = 128
_SUB = 8


def _cdiv(a, b):
    return -(-a // b)


def _round_up(x, m):
    return _cdiv(x, m) * m


def _tensorcores_per_device():
    """TensorCores behind one JAX device (megacore width). 1 on v5e/v6e."""
    try:
        kind = str(getattr(jax.devices()[0], "device_kind", "")).lower()
    except Exception:
        return 1
    # Megacore chips (2 TCs behind one device): v4, v5p, v7x ("tpu7x"/"v7x").
    if ("v4" in kind) or ("v5p" in kind) or ("7" in kind):
        return 2
    return 1


def _sse_partial_kernel(o_ref, l_ref, out_ref, *, tr, tiles_per_core,
                        valid_rows, need_mask):
    """Grid (core, tile): per-core sum of squared errors into an (8,128) slab."""
    c = pl.program_id(0)
    t = pl.program_id(1)

    @pl.when(t == 0)
    def _init():
        out_ref[...] = jnp.zeros_like(out_ref)

    def accumulate(mask_rows):
        diff = o_ref[...].astype(jnp.float32) - l_ref[...].astype(jnp.float32)
        sq = diff * diff
        if mask_rows:
            gt = c * tiles_per_core + t
            row = lax.broadcasted_iota(jnp.int32, sq.shape, 0)
            # Keep this a true select: ragged / clamped-overflow rows may hold
            # undefined VMEM data; select never propagates it (mask-multiply
            # would propagate NaN/Inf).
            sq = jnp.where(gt * tr + row < valid_rows, sq, 0.0)
        # Tiny full-extent block (tr not 8-aligned): pad rows with zeros so the
        # vreg-aligned reshape below is valid. Compile-time static, cheap.
        rem = (-sq.shape[0]) % _SUB
        if rem:
            sq = jnp.concatenate(
                [sq, jnp.zeros((rem, _LANE), jnp.float32)], axis=0)
        # Reduce whole vregs onto the resident (8,128) accumulator: VPU adds
        # only, no cross-lane work inside the grid loop.
        out_ref[...] += jnp.sum(sq.reshape(-1, _SUB, _LANE), axis=0)

    if need_mask:
        gt = c * tiles_per_core + t
        is_boundary = (gt + 1) * tr > valid_rows

        @pl.when(is_boundary)
        def _boundary():
            accumulate(True)

        @pl.when(jnp.logical_not(is_boundary))
        def _hot():
            accumulate(False)
    else:
        accumulate(False)


def rmse_loss(outputs, label, *, tile_rows=8192):
    assert outputs.shape == label.shape, "outputs and label must match"
    n = outputs.size
    assert n > 0

    flat_o = outputs.reshape(-1)
    flat_l = label.reshape(-1)

    # Minimal lane pad (only when n % 128 != 0) so a lane-dense (rows, 128)
    # view exists. Zero-padding both inputs contributes exactly zero squared
    # error, so no element mask is needed inside the last valid row.
    pad = (-n) % _LANE
    if pad:
        flat_o = jnp.pad(flat_o, (0, pad))
        flat_l = jnp.pad(flat_l, (0, pad))
    rows = (n + pad) // _LANE
    o2d = flat_o.reshape(rows, _LANE)
    l2d = flat_l.reshape(rows, _LANE)

    # ---- grid / tile selection (balanced across cores and steps) ----------
    tile_limit = max(int(tile_rows), _SUB)
    cores = _tensorcores_per_device()
    rows_al = _round_up(rows, _SUB)

    num_cores = cores if (cores > 1 and rows_al > _SUB) else 1
    rows_per_core = _round_up(_cdiv(rows_al, num_cores), _SUB)
    tiles_per_core = _cdiv(rows_per_core, tile_limit)
    tr = _round_up(_cdiv(rows_per_core, tiles_per_core), _SUB)
    if tr > rows:
        # Tiny input: a single full-extent block (need not be 8-aligned).
        tr = rows
        tiles_per_core = 1
        num_cores = 1

    total_real_tiles = _cdiv(rows, tr)
    need_mask = (num_cores * tiles_per_core * tr) != rows

    def in_map(c, t):
        # Clamp overflow tiles (only exist when need_mask) onto the last real
        # tile; their contribution is masked to zero inside the kernel.
        gt = c * tiles_per_core + t
        return (jnp.minimum(gt, total_real_tiles - 1), 0)

    kernel = functools.partial(
        _sse_partial_kernel,
        tr=tr,
        tiles_per_core=tiles_per_core,
        valid_rows=rows,
        need_mask=need_mask,
    )

    # Double-buffered inputs + headroom; well under every generation's VMEM.
    vmem_limit = int(2 * tr * _LANE *
                     (o2d.dtype.itemsize + l2d.dtype.itemsize)) + (8 << 20)

    partials = pl.pallas_call(
        kernel,
        out_shape=jax.ShapeDtypeStruct((num_cores * _SUB, _LANE), jnp.float32),
        grid_spec=pltpu.PrefetchScalarGridSpec(
            num_scalar_prefetch=0,
            grid=(num_cores, tiles_per_core),
            in_specs=[
                pl.BlockSpec((tr, _LANE), in_map),
                pl.BlockSpec((tr, _LANE), in_map),
            ],
            # Output block depends only on the core index -> resident across
            # the "arbitrary" tile axis; used directly as the accumulator.
            out_specs=pl.BlockSpec((_SUB, _LANE), lambda c, t: (c, 0)),
        ),
        compiler_params=pltpu.CompilerParams(
            dimension_semantics=("parallel", "arbitrary"),
            vmem_limit_bytes=vmem_limit),
    )(o2d, l2d)

    # Single cross-lane reduce + mean + sqrt, once, outside the hot loop.
    return jnp.sqrt(jnp.sum(partials) / jnp.float32(n))


def rmse_ref(outputs, label):
    err = outputs.astype(jnp.float32) - label.astype(jnp.float32)
    return jnp.sqrt(jnp.mean(err * err))


if __name__ == "__main__":
    key = jax.random.PRNGKey(0)
    k1, k2 = jax.random.split(key)

    # Main test: NCHW like the PyTorch module's typical inputs.
    shape = (2, 4, 16, 16)
    outputs = jax.random.uniform(k1, shape, dtype=jnp.float32)
    label = jax.random.uniform(k2, shape, dtype=jnp.float32)
    got = jax.block_until_ready(rmse_loss(outputs, label))
    want = jax.block_until_ready(rmse_ref(outputs, label))
    assert jnp.allclose(got, want, rtol=1e-5, atol=1e-6), (got, want)

    # Ragged rows + tiny tiles: exercises multi-tile grid, overflow-tile
    # clamping and the pl.when-gated boundary-mask path.
    shape2 = (2, 4, 16, 20)
    o2 = jax.random.uniform(k1, shape2, dtype=jnp.float32)
    l2 = jax.random.uniform(k2, shape2, dtype=jnp.float32)
    got2 = jax.block_until_ready(rmse_loss(o2, l2, tile_rows=8))
    want2 = jax.block_until_ready(rmse_ref(o2, l2))
    assert jnp.allclose(got2, want2, rtol=1e-5, atol=1e-6), (got2, want2)

    # n not a multiple of 128: minimal lane pad + tiny full-extent block.
    shape3 = (3, 5, 7, 11)
    o3 = jax.random.uniform(k1, shape3, dtype=jnp.float32)
    l3 = jax.random.uniform(k2, shape3, dtype=jnp.float32)
    got3 = jax.block_until_ready(rmse_loss(o3, l3))
    want3 = jax.block_until_ready(rmse_ref(o3, l3))
    assert jnp.allclose(got3, want3, rtol=1e-5, atol=1e-6), (got3, want3)

    print("KERNEL_OK")
</pallas_src>

<mosaic_0001>
module attributes {stable_mosaic.version = 11 : i64} {
  func.func @_sse_partial_kernel(%arg0: i32, %arg1: i32, %arg2: memref<16x128xf32, #tpu.memory_space<vmem>>, %arg3: memref<16x128xf32, #tpu.memory_space<vmem>>, %arg4: memref<8x128xf32, #tpu.memory_space<vmem>>) attributes {dimension_semantics = [#tpu.dimension_semantics<parallel>, #tpu.dimension_semantics<arbitrary>], iteration_bounds = array<i64: 1, 1>, scalar_prefetch = 0 : i64, scratch_operands = 0 : i64, tpu.core_type = #tpu.core_type<tc>, window_params = [{transform_indices = @transform_0, window_bounds = array<i64: 16, 128>}, {transform_indices = @transform_1, window_bounds = array<i64: 16, 128>}, {transform_indices = @transform_2, window_bounds = array<i64: 8, 128>}]} {
    %c0_i32 = arith.constant 0 : i32
    %0 = arith.cmpi eq, %arg1, %c0_i32 : i32
    %1 = arith.extui %0 : i1 to i32
    %c0_i32_0 = arith.constant 0 : i32
    %2 = arith.cmpi ne, %1, %c0_i32_0 : i32
    scf.if %2 {
      %cst_8 = arith.constant 0.000000e+00 : f32
      %12 = vector.broadcast %cst_8 : f32 to vector<8x128xf32>
      %c0_9 = arith.constant 0 : index
      %c0_10 = arith.constant 0 : index
      %13 = vector.load %arg4[%c0_9, %c0_10] : memref<8x128xf32, #tpu.memory_space<vmem>>, vector<8x128xf32>
      tpu.vector_store %arg4[%c0_9, %c0_10], %12 {strides = array<i32>} : memref<8x128xf32, #tpu.memory_space<vmem>>, vector<8x128xf32>,
    } else {
    }
    %c0 = arith.constant 0 : index
    %c0_1 = arith.constant 0 : index
    %3 = vector.load %arg2[%c0, %c0_1] : memref<16x128xf32, #tpu.memory_space<vmem>>, vector<16x128xf32>
    %c0_2 = arith.constant 0 : index
    %c0_3 = arith.constant 0 : index
    %4 = vector.load %arg3[%c0_2, %c0_3] : memref<16x128xf32, #tpu.memory_space<vmem>>, vector<16x128xf32>
    %5 = arith.subf %3, %4 : vector<16x128xf32>
    %6 = arith.mulf %5, %5 : vector<16x128xf32>
    %c0_4 = arith.constant 0 : index
    %c0_5 = arith.constant 0 : index
    %7 = vector.load %arg4[%c0_4, %c0_5] : memref<8x128xf32, #tpu.memory_space<vmem>>, vector<8x128xf32>
    %8 = vector.shape_cast %6 : vector<16x128xf32> to vector<2x8x128xf32>
    %cst = arith.constant dense<0.000000e+00> : vector<8x128xf32>
    %9 = vector.multi_reduction <add>, %8, %cst [0] : vector<2x8x128xf32> to vector<8x128xf32>
    %10 = arith.addf %7, %9 : vector<8x128xf32>
    %c0_6 = arith.constant 0 : index
    %c0_7 = arith.constant 0 : index
    %11 = vector.load %arg4[%c0_6, %c0_7] : memref<8x128xf32, #tpu.memory_space<vmem>>, vector<8x128xf32>
    tpu.vector_store %arg4[%c0_6, %c0_7], %10 {strides = array<i32>} : memref<8x128xf32, #tpu.memory_space<vmem>>, vector<8x128xf32>,
    return
  }
  func.func @transform_0(%arg0: i32, %arg1: i32) -> (i32, i32) {
    %c1_i32 = arith.constant 1 : i32
    %0 = arith.muli %arg0, %c1_i32 : i32
    %1 = arith.addi %0, %arg1 : i32
    %c0_i32 = arith.constant 0 : i32
    %2 = arith.minsi %1, %c0_i32 : i32
    %c0_i32_0 = arith.constant 0 : i32
    %c0_i32_1 = arith.constant 0 : i32
    return %2, %c0_i32_0 : i32, i32
  }
  func.func @transform_1(%arg0: i32, %arg1: i32) -> (i32, i32) {
    %c1_i32 = arith.constant 1 : i32
    %0 = arith.muli %arg0, %c1_i32 : i32
    %1 = arith.addi %0, %arg1 : i32
    %c0_i32 = arith.constant 0 : i32
    %2 = arith.minsi %1, %c0_i32 : i32
    %c0_i32_0 = arith.constant 0 : i32
    %c0_i32_1 = arith.constant 0 : i32
    return %2, %c0_i32_0 : i32, i32
  }
  func.func @transform_2(%arg0: i32, %arg1: i32) -> (i32, i32) {
    %c0_i32 = arith.constant 0 : i32
    %c0_i32_0 = arith.constant 0 : i32
    return %arg0, %c0_i32 : i32, i32
  }
}

</mosaic_0001>

<llo_original>
// kernel: tpu_custom_call.1
$region0: #{tpu_custom_call.1}
  #allocation0 [shape = 'u32[]', space=smem, size = 0x4, offset = 0x4, fixed_abs, tag = 'smem constant byte address 0x4 - core index']
  #allocation1 [shape = 'u32[144,128]{1,0:T(1,128)}', space=vmem, size = 0x12000, scoped, tag = 'internal scratch']
  %s0 = inlined_call_operand.hbm [shape: f32[16,128], index: 0, kind: input, shape index: {}]
  %s1 = inlined_call_operand.hbm [shape: f32[16,128], index: 1, kind: input, shape index: {}]
  %s2 = inlined_call_operand.hbm [shape: f32[8,128], index: 2, kind: output, shape index: {}]
  %s3 = sld [smem:[#allocation0]]
  $region30: #{tpu_custom_call.1} parent=0
    _
  %s5 = ssub.s32 1, %s3
  %s6 = scalar_select 0, %s5, %s3
  $region1: #{tpu_custom_call.1} parent=0
    #allocation2 [shape = 'u8[8192]{0}', space=vmem, size = 0x2000, scoped, tag = 'input window, operand 0, single buffered']
    #allocation3 [shape = 's32[1]{0}', space=sflag, size = 0x4, scoped, tag = 'scoped memory for tpu_custom_call.1']
    #allocation4 [shape = 's32[1]{0}', space=sflag, size = 0x4, scoped, tag = 'scoped memory for tpu_custom_call.1']
    #allocation5 [shape = 'u8[8192]{0}', space=vmem, size = 0x2000, scoped, tag = 'input window, operand 1, single buffered']
    #allocation6 [shape = 's32[1]{0}', space=sflag, size = 0x4, scoped, tag = 'scoped memory for tpu_custom_call.1']
    #allocation7 [shape = 'u8[4096]{0}', space=vmem, size = 0x1000, scoped, tag = 'output window, operand 0, single buffered']
    %7 = vsyncpa [#allocation3], 0
    %8 = vsyncpa [#allocation6], 0
    %9 = vsyncpa [#allocation4], 0
    // Predicated region
    $region2: #{tpu_custom_call.1} parent=1 // pred_check
      _
    $region3: #{tpu_custom_call.1} parent=1 // pred_check_branch
      %11 = sbr.rel (0) target = $region5
    $region4: #{tpu_custom_call.1} parent=1 // pred_region
      %s12 = sadd.s32 0, 0
      %p13 = scmp.lt.s32.totalorder %s12, 0
      %s14 = scalar_select %p13, %s12, 0
      %s15 = smul.u32 2, %s14
      %s17 = ssub.s32 256, 256
      %18 = vsyncadd [#allocation3], %s17
      %s19 = smul.addr %s15, 128
      %s20 = scalar_lea.hbm %s0, %s19
      %s21 = sshll.u32 [#allocation2], 4
      %s22 = int_to_ptr.vmem [resolvable:$true] %s21
      %27 = dma.hbm_to_vmem [thread:$0]  %s20, 256, %s22, [#allocation3], 128, 128, 8
    $region5: #{tpu_custom_call.1} parent=1 // pred_fallthru
      _
    // Predicated region
    $region6: #{tpu_custom_call.1} parent=1 // pred_check
      _
    $region7: #{tpu_custom_call.1} parent=1 // pred_check_branch
      %29 = sbr.rel (0) target = $region9
    $region8: #{tpu_custom_call.1} parent=1 // pred_region
      %s30 = sadd.s32 0, 0
      %p31 = scmp.lt.s32.totalorder %s30, 0
      %s32 = scalar_select %p31, %s30, 0
      %s33 = smul.u32 2, %s32
      %s35 = ssub.s32 256, 256
      %36 = vsyncadd [#allocation6], %s35
      %s37 = smul.addr %s33, 128
      %s38 = scalar_lea.hbm %s1, %s37
      %s39 = sshll.u32 [#allocation5], 4
      %s40 = int_to_ptr.vmem [resolvable:$true] %s39
      %45 = dma.hbm_to_vmem [thread:$0]  %s38, 256, %s40, [#allocation6], 128, 128, 8
    $region9: #{tpu_custom_call.1} parent=1 // pred_fallthru
      _
    // Predicated region
    $region10: #{tpu_custom_call.1} parent=1 // pred_check
      _
    $region11: #{tpu_custom_call.1} parent=1 // pred_check_branch
      %47 = sbr.rel (0) target = $region13
    $region12: #{tpu_custom_call.1} parent=1 // pred_region
      %48 = dma.done [#allocation3], 256
    $region13: #{tpu_custom_call.1} parent=1 // pred_fallthru
      _
    // Predicated region
    $region14: #{tpu_custom_call.1} parent=1 // pred_check
      _
    $region15: #{tpu_custom_call.1} parent=1 // pred_check_branch
      %50 = sbr.rel (0) target = $region17
    $region16: #{tpu_custom_call.1} parent=1 // pred_region
      %51 = dma.done [#allocation6], 256
    $region17: #{tpu_custom_call.1} parent=1 // pred_fallthru
      _
    %s52 = sadd.s32 0, 0
    %p53 = scmp.lt.s32.totalorder %s52, 0
    %s54 = scalar_select %p53, %s52, 0
    %s55 = smul.u32 2, %s54
    %s56 = sadd.s32 0, 0
    %p57 = scmp.lt.s32.totalorder %s56, 0
    %s58 = scalar_select %p57, %s56, 0
    %s59 = smul.u32 2, %s58
    %p60 = scmp.eq.s32.totalorder 0, 0
    // Predicated region
    $region18: #{tpu_custom_call.1} parent=1 // pred_check
      %p61 = pneg %p60
    $region19: #{tpu_custom_call.1} parent=1 // pred_check_branch
      %63 = sbr.rel (%p61) target = $region21
    $region20: #{tpu_custom_call.1} parent=1 // pred_region
      %64 = vst [vmem:[#allocation7] sm:$0xff] 0.0
    $region21: #{tpu_custom_call.1} parent=1 // pred_fallthru
      _
    %v65 = vld [vmem:[#allocation2] sm:$0xff]
    %v66 = vld [vmem:[#allocation2 + $0x8] sm:$0xff]
    %v67 = vld [vmem:[#allocation5] sm:$0xff]
    %v68 = vld [vmem:[#allocation5 + $0x8] sm:$0xff]
    %v69 = vsub.f32 %v65, %v67
    %v70 = vsub.f32 %v66, %v68
    %v71 = vmul.f32 %v69, %v69
    %v72 = vmul.f32 %v70, %v70
    %v73 = vld [vmem:[#allocation7] sm:$0xff]
    %v74 = vadd.f32 %v71, %v72
    %v75 = vadd.f32 %v73, %v74
    %76 = vst [vmem:[#allocation7] sm:$0xff] %v75
    // Predicated region
    $region22: #{tpu_custom_call.1} parent=1 // pred_check
      _
    $region23: #{tpu_custom_call.1} parent=1 // pred_check_branch
      %78 = sbr.rel (0) target = $region25
    $region24: #{tpu_custom_call.1} parent=1 // pred_region
      %s80 = ssub.s32 128, 128
      %81 = vsyncadd [#allocation4], %s80
      %s83 = sshll.u32 [#allocation7], 4
      %s84 = int_to_ptr.vmem [resolvable:$true] %s83
      %86 = dma.vmem_to_hbm [thread:$0]  %s84, 128, %s2, [#allocation4]
    $region25: #{tpu_custom_call.1} parent=1 // pred_fallthru
      _
    // Predicated region
    $region26: #{tpu_custom_call.1} parent=1 // pred_check
      _
    $region27: #{tpu_custom_call.1} parent=1 // pred_check_branch
      %88 = sbr.rel (0) target = $region29
    $region28: #{tpu_custom_call.1} parent=1 // pred_region
      %89 = dma.done [#allocation4], 128
    $region29: #{tpu_custom_call.1} parent=1 // pred_fallthru
      _
    %90 = vsyncpa [#allocation3], 1
    %91 = vsyncpa [#allocation6], 1
    %92 = vsyncpa [#allocation4], 1

</llo_original>
